<compile_context>
chip_gen: v7x
topology: tpu7x:2x2x1
jax: 0.10.0
libtpu: 0.0.40
codegen_flags: <defaults>
</compile_context>

<pallas_src>
import functools

import jax
import jax.numpy as jnp
from jax.experimental import pallas as pl
from jax.experimental.pallas import tpu as pltpu


def _elu_kernel(x_ref, o_ref, *, alpha: float):
    x = x_ref[...]
    # Negative branch exactly as the reference module: alpha * (exp(x) - 1).
    # exp() runs on the EUP slot; remaining VALU work is sub + (optional mul) +
    # cmp + select, safely HBM-bound even for bf16 inputs / v5e (f32-only VALU).
    neg = jnp.exp(x) - 1.0
    if alpha != 1.0:                      # trace-time constant: drop mul for alpha == 1
        neg = alpha * neg
    o_ref[...] = jnp.where(x > 0, x, neg)


def _round_up(v: int, m: int) -> int:
    return -(-v // m) * m


def my_elu(
    x: jax.Array,
    alpha: float = 1.0,
    *,
    target_tile_bytes: int = 8 << 20,          # ~8 MiB input tile (perf review: v7x/v6e)
    small_input_fallback_bytes: int = 1 << 20,  # below this, plain XLA is as fast & fuses
) -> jax.Array:
    if alpha < 0:
        raise ValueError(f"alpha should be >= 0, but got {alpha}")
    orig_shape = x.shape
    dtype = x.dtype
    n = x.size
    if n == 0:
        return x
    itemsize = jnp.dtype(dtype).itemsize

    # --- Small-input fast path: pallas_call launch cost dominates tiny tensors. ---
    if n * itemsize < small_input_fallback_bytes:
        neg = jnp.exp(x) - 1.0
        if alpha != 1.0:
            neg = alpha * neg
        return jnp.where(x > 0, x, neg).astype(dtype)

    kernel = functools.partial(_elu_kernel, alpha=float(alpha))
    cparams = pltpu.CompilerParams(
        dimension_semantics=("parallel",),  # shard the grid across v7x's 2 TensorCores
        vmem_limit_bytes=48 << 20,          # 2x(in+out) tiles ~32 MiB < 48 < 64 MiB (v7x)
    )
    cost = pl.CostEstimate(
        flops=5 * n, transcendentals=n, bytes_accessed=2 * n * itemsize
    )

    if n % 128 == 0:
        # --- Common case: lane-dense 2-D view, zero copies. ---
        lanes = next(c for c in (1024, 512, 256, 128) if n % c == 0)
        rows = n // lanes
        x2d = x.reshape(rows, lanes)  # free view of the contiguous buffer

        # ~target_tile_bytes per input tile, rounded to a multiple of 32 sublanes
        # (aligned for f32 / bf16 / 8-bit packing -> unmasked stores on main blocks).
        block_rows = max(32, (target_tile_bytes // (lanes * itemsize)) // 32 * 32)
        if block_rows >= rows:
            # Never collapse to a single grid step when we can split: one TC cannot
            # saturate v7x chip HBM, so give both TensorCores work.
            block_rows = _round_up(pl.cdiv(rows, 2), 32) if rows > 32 else rows
        nb = pl.cdiv(rows, block_rows)
        if nb > 1 and nb % 2 == 1:
            # Prefer an even step count so neither v7x TC idles on the last step.
            cand = max(32, _round_up(pl.cdiv(rows, nb + 1), 32))
            if pl.cdiv(rows, cand) % 2 == 0:
                block_rows = cand
                nb = pl.cdiv(rows, cand)

        out2d = pl.pallas_call(
            kernel,
            out_shape=jax.ShapeDtypeStruct((rows, lanes), dtype),
            grid_spec=pltpu.PrefetchScalarGridSpec(
                num_scalar_prefetch=0,
                grid=(nb,),
                in_specs=[pl.BlockSpec((block_rows, lanes), lambda i: (i, 0))],
                out_specs=pl.BlockSpec((block_rows, lanes), lambda i: (i, 0)),
            ),
            compiler_params=cparams,
            cost_estimate=cost,
        )(x2d)
        return out2d.reshape(orig_shape)

    # --- Rare ragged case (numel not a multiple of 128): flat 1-D, zero copies. ---
    # The pipeline masks the ragged last block, so there is no full-array pad and no
    # output slice (1x read + 1x write instead of ~3x); this trades some sublane
    # density for minimal HBM traffic on a bandwidth-bound op.
    xflat = x.reshape(-1)
    block = max(1024, (target_tile_bytes // itemsize) // 1024 * 1024)
    if block >= n:
        block = _round_up(pl.cdiv(n, 2), 128) if n > 1024 else _round_up(n, 128)
    nb = pl.cdiv(n, block)

    outf = pl.pallas_call(
        kernel,
        out_shape=jax.ShapeDtypeStruct((n,), dtype),
        grid_spec=pltpu.PrefetchScalarGridSpec(
            num_scalar_prefetch=0,
            grid=(nb,),
            in_specs=[pl.BlockSpec((block,), lambda i: (i,))],
            out_specs=pl.BlockSpec((block,), lambda i: (i,)),
        ),
        compiler_params=cparams,
        cost_estimate=cost,
    )(xflat)
    return outf.reshape(orig_shape)


if __name__ == "__main__":
    key = jax.random.PRNGKey(0)

    # Small NCHW input consistent with an elementwise activation module.
    # Force the Pallas path (the default small-input fast path would bypass it).
    x = jax.random.normal(key, (2, 4, 16, 16), dtype=jnp.float32)
    alpha = 1.0
    y = jax.block_until_ready(my_elu(x, alpha, small_input_fallback_bytes=0))
    y_ref = jnp.where(x > 0, x, alpha * (jnp.exp(x) - 1.0))
    assert y.shape == x.shape and y.dtype == x.dtype
    assert jnp.allclose(y, y_ref, atol=1e-6, rtol=1e-6)

    # Ragged size (numel not a multiple of 128) + alpha != 1 exercises the 1-D path.
    x2 = jax.random.normal(jax.random.PRNGKey(1), (3, 5, 7, 11), dtype=jnp.float32)
    a2 = 1.3
    y2 = jax.block_until_ready(my_elu(x2, a2, small_input_fallback_bytes=0))
    y2_ref = jnp.where(x2 > 0, x2, a2 * (jnp.exp(x2) - 1.0))
    assert y2.shape == x2.shape and y2.dtype == x2.dtype
    assert jnp.allclose(y2, y2_ref, atol=1e-6, rtol=1e-6)

    # Default small-input fast path (plain fused XLA) gives the same result.
    y3 = jax.block_until_ready(my_elu(x, alpha))
    assert jnp.allclose(y3, y_ref, atol=1e-6, rtol=1e-6)

    print("KERNEL_OK")
</pallas_src>

<mosaic_0001>
module attributes {stable_mosaic.version = 11 : i64} {
  func.func @_elu_kernel(%arg0: i32, %arg1: memref<2x1024xf32, #tpu.memory_space<vmem>>, %arg2: memref<2x1024xf32, #tpu.memory_space<vmem>>) attributes {dimension_semantics = [#tpu.dimension_semantics<parallel>], iteration_bounds = array<i64: 1>, scalar_prefetch = 0 : i64, scratch_operands = 0 : i64, tpu.core_type = #tpu.core_type<tc>, window_params = [{transform_indices = @transform_0, window_bounds = array<i64: 2, 1024>}, {transform_indices = @transform_1, window_bounds = array<i64: 2, 1024>}]} {
    %c0 = arith.constant 0 : index
    %c0_0 = arith.constant 0 : index
    %0 = vector.load %arg1[%c0, %c0_0] : memref<2x1024xf32, #tpu.memory_space<vmem>>, vector<2x1024xf32>
    %1 = math.exp %0 : vector<2x1024xf32>
    %cst = arith.constant 1.000000e+00 : f32
    %2 = vector.broadcast %cst : f32 to vector<2x1024xf32>
    %3 = arith.subf %1, %2 : vector<2x1024xf32>
    %cst_1 = arith.constant 0.000000e+00 : f32
    %4 = vector.broadcast %cst_1 : f32 to vector<2x1024xf32>
    %5 = arith.cmpf ogt, %0, %4 : vector<2x1024xf32>
    %6 = arith.select %5, %0, %3 : vector<2x1024xi1>, vector<2x1024xf32>
    %c0_2 = arith.constant 0 : index
    %c0_3 = arith.constant 0 : index
    %7 = vector.load %arg2[%c0_2, %c0_3] : memref<2x1024xf32, #tpu.memory_space<vmem>>, vector<2x1024xf32>
    tpu.vector_store %arg2[%c0_2, %c0_3], %6 {strides = array<i32>} : memref<2x1024xf32, #tpu.memory_space<vmem>>, vector<2x1024xf32>,
    return
  }
  func.func @transform_0(%arg0: i32) -> (i32, i32) {
    %c0_i32 = arith.constant 0 : i32
    %c0_i32_0 = arith.constant 0 : i32
    return %arg0, %c0_i32 : i32, i32
  }
  func.func @transform_1(%arg0: i32) -> (i32, i32) {
    %c0_i32 = arith.constant 0 : i32
    %c0_i32_0 = arith.constant 0 : i32
    return %arg0, %c0_i32 : i32, i32
  }
}

</mosaic_0001>

<llo_original>
// kernel: tpu_custom_call.1
$region0: #{tpu_custom_call.1}
  #allocation0 [shape = 'u32[]', space=smem, size = 0x4, offset = 0x4, fixed_abs, tag = 'smem constant byte address 0x4 - core index']
  #allocation1 [shape = 'u32[144,128]{1,0:T(1,128)}', space=vmem, size = 0x12000, scoped, tag = 'internal scratch']
  %s0 = inlined_call_operand.hbm [shape: f32[2,1024], index: 0, kind: input, shape index: {}]
  %s1 = inlined_call_operand.hbm [shape: f32[2,1024], index: 1, kind: output, shape index: {}]
  %s2 = sld [smem:[#allocation0]]
  $region18: #{tpu_custom_call.1} parent=0
    _
  %s4 = ssub.s32 1, %s2
  %s5 = scalar_select 0, %s4, %s2
  $region1: #{tpu_custom_call.1} parent=0
    #allocation2 [shape = 'u8[8192]{0}', space=vmem, size = 0x2000, scoped, tag = 'input window, operand 0, single buffered']
    #allocation3 [shape = 's32[1]{0}', space=sflag, size = 0x4, scoped, tag = 'scoped memory for tpu_custom_call.1']
    #allocation4 [shape = 's32[1]{0}', space=sflag, size = 0x4, scoped, tag = 'scoped memory for tpu_custom_call.1']
    #allocation5 [shape = 'u8[8192]{0}', space=vmem, size = 0x2000, scoped, tag = 'output window, operand 0, single buffered']
    %6 = vsyncpa [#allocation3], 0
    %7 = vsyncpa [#allocation4], 0
    // Predicated region
    $region2: #{tpu_custom_call.1} parent=1 // pred_check
      _
    $region3: #{tpu_custom_call.1} parent=1 // pred_check_branch
      %9 = sbr.rel (0) target = $region5
    $region4: #{tpu_custom_call.1} parent=1 // pred_region
      %s11 = ssub.s32 256, 256
      %12 = vsyncadd [#allocation3], %s11
      %s14 = sshll.u32 [#allocation2], 4
      %s15 = int_to_ptr.vmem [resolvable:$true] %s14
      %17 = dma.hbm_to_vmem [thread:$0]  %s0, 256, %s15, [#allocation3]
    $region5: #{tpu_custom_call.1} parent=1 // pred_fallthru
      _
    // Predicated region
    $region6: #{tpu_custom_call.1} parent=1 // pred_check
      _
    $region7: #{tpu_custom_call.1} parent=1 // pred_check_branch
      %19 = sbr.rel (0) target = $region9
    $region8: #{tpu_custom_call.1} parent=1 // pred_region
      %20 = dma.done [#allocation3], 256
    $region9: #{tpu_custom_call.1} parent=1 // pred_fallthru
      _
    %v21 = vld [vmem:[#allocation2] sm:$0xff]
    %v22 = vld [vmem:[#allocation2 + $0x8] sm:$0xff]
    %v23 = vmul.f32 %v21, 1.442695
    %v24 = vpow.pop %v23
    %v25 = vmul.f32 %v22, 1.442695
    %v26 = vpow.pop %v25
    %v27 = vsub.f32 %v24, 1.0
    %v28 = vsub.f32 %v26, 1.0
    %vm29 = vcmp.gt.f32.partialorder %v21, 0.0
    %vm30 = vcmp.gt.f32.partialorder %v22, 0.0
    %v31 = vsel %vm29, %v21, %v27
    %v32 = vsel %vm30, %v22, %v28
    %33 = vst [vmem:[#allocation5] sm:$0xff] %v31
    %34 = vst [vmem:[#allocation5 + $0x8] sm:$0xff] %v32
    // Predicated region
    $region10: #{tpu_custom_call.1} parent=1 // pred_check
      _
    $region11: #{tpu_custom_call.1} parent=1 // pred_check_branch
      %36 = sbr.rel (0) target = $region13
    $region12: #{tpu_custom_call.1} parent=1 // pred_region
      %s38 = ssub.s32 256, 256
      %39 = vsyncadd [#allocation4], %s38
      %s41 = sshll.u32 [#allocation5], 4
      %s42 = int_to_ptr.vmem [resolvable:$true] %s41
      %44 = dma.vmem_to_hbm [thread:$0]  %s42, 256, %s1, [#allocation4]
    $region13: #{tpu_custom_call.1} parent=1 // pred_fallthru
      _
    // Predicated region
    $region14: #{tpu_custom_call.1} parent=1 // pred_check
      _
    $region15: #{tpu_custom_call.1} parent=1 // pred_check_branch
      %46 = sbr.rel (0) target = $region17
    $region16: #{tpu_custom_call.1} parent=1 // pred_region
      %47 = dma.done [#allocation4], 256
    $region17: #{tpu_custom_call.1} parent=1 // pred_fallthru
      _
    %48 = vsyncpa [#allocation3], 1
    %49 = vsyncpa [#allocation4], 1

</llo_original>
